<compile_context>
chip_gen: v5e
topology: v5e:2x2
jax: 0.10.0
libtpu: 0.0.40
codegen_flags: <defaults>
</compile_context>

<pallas_src>
import functools

import jax
import jax.numpy as jnp
from jax.experimental import pallas as pl
from jax.experimental.pallas import tpu as pltpu


def _round_up(v, m):
    return ((v + m - 1) // m) * m


@functools.lru_cache(maxsize=None)
def _tpu_vmem_and_cores():
    """Best-effort (VMEM capacity bytes, is_multi_tensorcore) query."""
    vmem = 64 * 1024 * 1024          # conservative fallback (v7x per-TC VMEM)
    multi_tc = False
    try:
        info = pltpu.get_tpu_info()
        vmem = int(getattr(info, "vmem_capacity_bytes", vmem))
        for attr in ("num_cores", "tensor_core_count", "num_tensorcores", "core_count"):
            val = getattr(info, attr, None)
            if val is not None:
                multi_tc = int(val) > 1
                break
    except Exception:
        pass
    try:
        kind = jax.devices()[0].device_kind.lower()
        if ("v4" in kind) or ("v5p" in kind) or ("7" in kind):
            multi_tc = True              # megacore: 2 TensorCores per device
    except Exception:
        pass
    return vmem, multi_tc


def _choose_block_m(M, H, N_pad, x_bytes, vmem_budget, multi_tc):
    """Row tile: dtype-aware sublane multiple, VMEM-budgeted, generation-aware grid."""
    sub = {4: 8, 2: 16, 1: 32}.get(x_bytes, 8)   # min sublane tile per dtype
    if M <= sub:
        return M                                  # tiny: single full tile

    out_bytes = x_bytes
    # Conservative accounting: x/out tiles double-buffered; weight+bias also
    # counted 2x (they are grid-invariant, so this over-counts slightly).
    fixed = 2 * (N_pad * H * x_bytes + N_pad * 4)
    per_row = 2 * (H * x_bytes + N_pad * out_bytes)
    cap = (vmem_budget - fixed) // per_row
    cap = max(sub, (cap // sub) * sub)
    cap = min(cap, 2048)

    m_full = _round_up(M, sub)
    if m_full <= cap and not multi_tc:
        # Single TensorCore: one full tile -> no per-grid-step overhead.
        return m_full

    steps = pl.cdiv(m_full, cap)
    if multi_tc:
        steps = max(steps, 2)
        if steps % 2:
            steps += 1           # even step count keeps both TCs busy on the tail
    block_m = _round_up(pl.cdiv(M, steps), sub)
    return min(block_m, cap)


def _slot_classifier_kernel(x_ref, w_ref, b_ref, o_ref):
    # x_ref: (TM, H)  w_ref: (H, N_pad)  b_ref: (1, N_pad) f32  o_ref: (TM, N_pad)
    acc = jnp.dot(x_ref[...], w_ref[...], preferred_element_type=jnp.float32)
    o_ref[...] = (acc + b_ref[...]).astype(o_ref.dtype)


@functools.partial(jax.jit, static_argnames=("block_m", "n_pad", "vmem_limit"))
def _slot_classifier_call(x, weight, bias, *, block_m, n_pad, vmem_limit):
    B, S, H = x.shape
    N = weight.shape[0]
    M = B * S

    steps = pl.cdiv(M, block_m)
    m_pad = steps * block_m

    x2d = x.reshape(M, H)
    if m_pad != M:
        x2d = jnp.pad(x2d, ((0, m_pad - M), (0, 0)))

    # One-time wrapper transpose: kernel sees an NN-layout [H, N_pad] weight,
    # so every grid step is pure vmatmul (no repeated XLU transpose).
    w_t = jnp.pad(weight, ((0, n_pad - N), (0, 0))).T
    b2d = jnp.pad(bias.astype(jnp.float32), (0, n_pad - N)).reshape(1, n_pad)

    out2d = pl.pallas_call(
        _slot_classifier_kernel,
        out_shape=jax.ShapeDtypeStruct((m_pad, n_pad), x.dtype),
        grid_spec=pltpu.PrefetchScalarGridSpec(
            num_scalar_prefetch=0,
            grid=(steps,),
            in_specs=[
                pl.BlockSpec((block_m, H), lambda i: (i, 0)),   # x row tile
                pl.BlockSpec((H, n_pad), lambda i: (0, 0)),     # full weight [H, N_pad]
                pl.BlockSpec((1, n_pad), lambda i: (0, 0)),     # bias (f32)
            ],
            out_specs=pl.BlockSpec((block_m, n_pad), lambda i: (i, 0)),
        ),
        compiler_params=pltpu.CompilerParams(
            dimension_semantics=("parallel",),
            vmem_limit_bytes=vmem_limit,
        ),
    )(x2d, w_t, b2d)

    # TODO(synk): consumers that can mask/ignore the pad columns could take the
    # padded slab directly and skip this slice pass; kept to match the module's
    # exact output shape.
    return out2d[:M, :N].reshape(B, S, N)


def slot_classifier(x, weight, bias):
    """x: [B, S, H]  weight: [N, H] (PyTorch nn.Linear layout)  bias: [N] -> [B, S, N]."""
    B, S, H = x.shape
    N = weight.shape[0]
    M = B * S

    n_pad = max(128, _round_up(N, 128))               # lane-dense output
    x_bytes = jnp.dtype(x.dtype).itemsize

    vmem_cap, multi_tc = _tpu_vmem_and_cores()
    vmem_limit = min((vmem_cap * 3) // 4, 100 * 1024 * 1024)   # 96 MiB (v5e/v6e) / 48 MiB (v7x)
    budget = min((vmem_cap * 5) // 8, vmem_limit - (8 << 20))  # 80 MiB / 40 MiB planner budget

    block_m = _choose_block_m(M, H, n_pad, x_bytes, budget, multi_tc)

    return _slot_classifier_call(
        x, weight, bias, block_m=block_m, n_pad=n_pad, vmem_limit=int(vmem_limit)
    )


if __name__ == "__main__":
    # Small shapes consistent with the module: BERT-like token features.
    batch, seq, hidden = 2, 8, 32
    num_slot_labels = 16

    key = jax.random.PRNGKey(0)
    kx, kw, kb = jax.random.split(key, 3)

    x = jax.random.normal(kx, (batch, seq, hidden), dtype=jnp.float32)

    # Deterministic parameter init mimicking nn.Linear's uniform(-1/sqrt(H), 1/sqrt(H)).
    bound = 1.0 / (hidden ** 0.5)
    weight = jax.random.uniform(
        kw, (num_slot_labels, hidden), minval=-bound, maxval=bound, dtype=jnp.float32
    )
    bias = jax.random.uniform(
        kb, (num_slot_labels,), minval=-bound, maxval=bound, dtype=jnp.float32
    )

    out = slot_classifier(x, weight, bias)
    out = jax.block_until_ready(out)

    # Reference check (plain JAX) — same semantics as dropout(0.0) + Linear.
    ref = x @ weight.T + bias
    assert out.shape == (batch, seq, num_slot_labels)
    assert jnp.allclose(out, ref, atol=1e-5, rtol=1e-5), "mismatch vs reference"

    print("KERNEL_OK")
</pallas_src>

<mosaic_0001>
module attributes {stable_mosaic.version = 11 : i64} {
  func.func @_slot_classifier_kernel(%arg0: i32, %arg1: memref<16x32xf32, #tpu.memory_space<vmem>>, %arg2: memref<32x128xf32, #tpu.memory_space<vmem>>, %arg3: memref<1x128xf32, #tpu.memory_space<vmem>>, %arg4: memref<16x128xf32, #tpu.memory_space<vmem>>) attributes {dimension_semantics = [#tpu.dimension_semantics<parallel>], iteration_bounds = array<i64: 1>, scalar_prefetch = 0 : i64, scratch_operands = 0 : i64, tpu.core_type = #tpu.core_type<tc>, window_params = [{transform_indices = @transform_0, window_bounds = array<i64: 16, 32>}, {pipeline_mode = #tpu.pipeline_mode<synchronous>, transform_indices = @transform_1, window_bounds = array<i64: 32, 128>}, {pipeline_mode = #tpu.pipeline_mode<synchronous>, transform_indices = @transform_2, window_bounds = array<i64: 1, 128>}, {transform_indices = @transform_3, window_bounds = array<i64: 16, 128>}]} {
    %c0 = arith.constant 0 : index
    %c0_0 = arith.constant 0 : index
    %0 = vector.load %arg1[%c0, %c0_0] : memref<16x32xf32, #tpu.memory_space<vmem>>, vector<16x32xf32>
    %c0_1 = arith.constant 0 : index
    %c0_2 = arith.constant 0 : index
    %1 = vector.load %arg2[%c0_1, %c0_2] : memref<32x128xf32, #tpu.memory_space<vmem>>, vector<32x128xf32>
    %cst = arith.constant dense<0.000000e+00> : vector<16x128xf32>
    %2 = tpu.matmul %0, %1, %cst {dimension_numbers = #tpu.dot_dimension_numbers<[1], [0], [0], [1], [0, 0, 1, 1], [], []>} : vector<16x32xf32>, vector<32x128xf32>, vector<16x128xf32> -> vector<16x128xf32>
    %c0_3 = arith.constant 0 : index
    %c0_4 = arith.constant 0 : index
    %3 = vector.load %arg3[%c0_3, %c0_4] : memref<1x128xf32, #tpu.memory_space<vmem>>, vector<1x128xf32>
    %4 = vector.broadcast %3 : vector<1x128xf32> to vector<16x128xf32>
    %5 = arith.addf %2, %4 : vector<16x128xf32>
    %c0_5 = arith.constant 0 : index
    %c0_6 = arith.constant 0 : index
    %6 = vector.load %arg4[%c0_5, %c0_6] : memref<16x128xf32, #tpu.memory_space<vmem>>, vector<16x128xf32>
    tpu.vector_store %arg4[%c0_5, %c0_6], %5 {strides = array<i32>} : memref<16x128xf32, #tpu.memory_space<vmem>>, vector<16x128xf32>,
    return
  }
  func.func @transform_0(%arg0: i32) -> (i32, i32) {
    %c0_i32 = arith.constant 0 : i32
    %c0_i32_0 = arith.constant 0 : i32
    return %arg0, %c0_i32 : i32, i32
  }
  func.func @transform_1(%arg0: i32) -> (i32, i32) {
    %c0_i32 = arith.constant 0 : i32
    %c0_i32_0 = arith.constant 0 : i32
    %c0_i32_1 = arith.constant 0 : i32
    return %c0_i32, %c0_i32_0 : i32, i32
  }
  func.func @transform_2(%arg0: i32) -> (i32, i32) {
    %c0_i32 = arith.constant 0 : i32
    %c0_i32_0 = arith.constant 0 : i32
    %c0_i32_1 = arith.constant 0 : i32
    return %c0_i32, %c0_i32_0 : i32, i32
  }
  func.func @transform_3(%arg0: i32) -> (i32, i32) {
    %c0_i32 = arith.constant 0 : i32
    %c0_i32_0 = arith.constant 0 : i32
    return %arg0, %c0_i32 : i32, i32
  }
}

</mosaic_0001>

<llo_original>
// kernel: _slot_classifier_call.1
$region0: #{_slot_classifier_call.1}
  #allocation0 [shape = 'u32[]', space=smem, size = 0x4, offset = 0x4, fixed_abs, tag = 'smem constant byte address 0x4 - core index']
  #allocation1 [shape = 'u32[72,128]{1,0:T(1,128)}', space=vmem, size = 0x9000, scoped, tag = 'internal scratch']
  %s0 = inlined_call_operand.vmem [shape: f32[16,32], index: 0, kind: input, shape index: {}]
  %s1 = inlined_call_operand.vmem [shape: f32[32,128], index: 1, kind: input, shape index: {}]
  %s2 = inlined_call_operand.vmem [shape: f32[1,128], index: 2, kind: input, shape index: {}]
  %s3 = inlined_call_operand.vmem [shape: f32[16,128], index: 3, kind: output, shape index: {}]
  %s4 = sld [smem:[#allocation0]]
  $region22: #{_slot_classifier_call.1} parent=0
    _
  %s6 = ssub.s32 1, %s4
  %s7 = scalar_select 0, %s6, %s4
  // Predicated region
  $region2: #{_slot_classifier_call.1} parent=0 // pred_check
    _
  $region3: #{_slot_classifier_call.1} parent=0 // pred_check_branch
    %9 = sbr.rel (0) target = $region5
  $region4: #{_slot_classifier_call.1} parent=0 // pred_region
    _
  $region5: #{_slot_classifier_call.1} parent=0 // pred_fallthru
    _
  // Predicated region
  $region6: #{_slot_classifier_call.1} parent=0 // pred_check
    _
  $region7: #{_slot_classifier_call.1} parent=0 // pred_check_branch
    %11 = sbr.rel (0) target = $region9
  $region8: #{_slot_classifier_call.1} parent=0 // pred_region
    _
  $region9: #{_slot_classifier_call.1} parent=0 // pred_fallthru
    _
  // Predicated region
  $region10: #{_slot_classifier_call.1} parent=0 // pred_check
    _
  $region11: #{_slot_classifier_call.1} parent=0 // pred_check_branch
    %13 = sbr.rel (0) target = $region13
  $region12: #{_slot_classifier_call.1} parent=0 // pred_region
    _
  $region13: #{_slot_classifier_call.1} parent=0 // pred_fallthru
    _
  %v14 = vld [vmem:[%s0] sm:$0xff]
  %v15 = vld [vmem:[%s0 + $0x8] sm:$0xff]
  %v16 = vld [vmem:[%s1] sm:$0xff]
  %v17 = vld [vmem:[%s1 + $0x8] sm:$0xff]
  %v18 = vld [vmem:[%s1 + $0x10] sm:$0xff]
  %v19 = vld [vmem:[%s1 + $0x18] sm:$0xff]
  %v20 = vld [vmem:[%s2] sm:$0x1]
  %v22 = vperm.slane %v20, 0
  %vm24 = vcmask 261120
  %v26 = vsel %vm24, %v14, 0
  %v29 = vsel %vm24, %v15, 0
  %31 = vmatpush.msra.mxu0 0.0
  %32 = vmatpush.msra.mxu0 0.0
  %33 = vmatpush.msra.mxu0 0.0
  %34 = vmatpush.msra.mxu0 0.0
  %35 = vmatpush.msra.mxu0 0.0
  %36 = vmatpush.msra.mxu0 0.0
  %37 = vmatpush.msra.mxu0 0.0
  %38 = vmatpush.msra.mxu0 0.0
  %39 = vmatpush.msra.mxu0 0.0
  %40 = vmatpush.msra.mxu0 0.0
  %41 = vmatpush.msra.mxu0 0.0
  %42 = vmatpush.msra.mxu0 0.0
  %43 = vmatpush.msra.mxu0 %v19
  %44 = vmatpush.msra.mxu0 %v18
  %45 = vmatpush.msra.mxu0 %v17
  %46 = vmatpush.msra.mxu0 %v16
  %47 = vmatmul.f32.gmra.mxu0 %v26
  %v48 = vpop.f32.mrf.mxu0
  %v49 = vadd.f32 %v22, %v48
  %50 = vmatmul.f32.gmra.mxu0 %v29
  %v51 = vpop.f32.mrf.mxu0
  %v52 = vadd.f32 %v22, %v51
  %53 = vdwg.mxu0
  %54 = vst [vmem:[%s3] sm:$0xff] %v49
  %55 = vst [vmem:[%s3 + $0x8] sm:$0xff] %v52
  // Predicated region
  $region14: #{_slot_classifier_call.1} parent=0 // pred_check
    _
  $region15: #{_slot_classifier_call.1} parent=0 // pred_check_branch
    %57 = sbr.rel (0) target = $region17
  $region16: #{_slot_classifier_call.1} parent=0 // pred_region
    _
  $region17: #{_slot_classifier_call.1} parent=0 // pred_fallthru
    _
  // Predicated region
  $region18: #{_slot_classifier_call.1} parent=0 // pred_check
    _
  $region19: #{_slot_classifier_call.1} parent=0 // pred_check_branch
    %59 = sbr.rel (0) target = $region21
  $region20: #{_slot_classifier_call.1} parent=0 // pred_region
    _
  $region21: #{_slot_classifier_call.1} parent=0 // pred_fallthru
    _

</llo_original>
